<compile_context>
chip_gen: v5e
topology: v5e:2x2
jax: 0.10.0
libtpu: 0.0.40
codegen_flags: <defaults>
</compile_context>

<pallas_src>
import functools

import jax
import jax.numpy as jnp
from jax.experimental import pallas as pl
from jax.experimental.pallas import tpu as pltpu


_LANE = 128
_MAX_TILE_F = 2048
_MAX_TILE_N = 4096
# Below this much total HBM traffic ((L+1)*N*F*itemsize) a pallas_call is
# dominated by launch + pipeline-prologue overhead; let XLA fuse a maximum
# chain instead.
_MIN_PALLAS_BYTES = 512 * 1024


def _round_up(x, m):
    return ((x + m - 1) // m) * m


def _sublane(dtype):
    """Sublane packing multiple for the row axis (8 f32 / 16 bf16 / 32 int8)."""
    return max(8, 32 // max(dtype.itemsize, 1))


@functools.lru_cache(maxsize=1)
def _tpu_params():
    """Returns (vmem_budget_bytes, vmem_limit_bytes, two_tensorcores)."""
    vmem_phys = 128 * 1024 * 1024
    try:
        vmem_phys = int(pltpu.get_tpu_info().vmem_capacity_bytes)
    except Exception:
        pass  # conservative default (treated as v5e/v6e-class)
    if vmem_phys <= 64 * 1024 * 1024:
        # v7x-class: 64 MiB physical VMEM per TensorCore, 2 TCs per chip.
        # Leave headroom for Mosaic internal scratch.
        return 16 * 1024 * 1024, 28 * 1024 * 1024, True
    # v5e / v6e: 128 MiB physical VMEM, 1 TensorCore per chip.
    return 24 * 1024 * 1024, 48 * 1024 * 1024, False


def _make_max_kernel(num_layers):
    def kernel(*refs):
        x_refs, o_ref = refs[:num_layers], refs[num_layers]
        acc = x_refs[0][...]
        for r in x_refs[1:]:
            acc = jnp.maximum(acc, r[...])
        o_ref[...] = acc
    return kernel


def _choose_tiles(num_layers, n, f, dtype, budget_bytes, two_cores):
    """Pick (tile_n, tile_f). Caller guarantees n >= sublane(dtype)."""
    sub = _sublane(dtype)

    # Lane axis: keep the block width a multiple of 128 whenever F allows it,
    # so stores are lane-dense unmasked vst; Pallas masks only the edge block.
    if f <= _LANE:
        tile_f = f                                   # full dim: always legal
    elif f % _LANE == 0:
        tile_f = min(f, _MAX_TILE_F)
    else:
        tile_f = min((f // _LANE) * _LANE, _MAX_TILE_F)

    # Row axis: as tall as the double-buffered VMEM budget allows for the
    # (L inputs + 1 output) blocks, capped at _MAX_TILE_N and at N.
    bytes_per_row = 2 * (num_layers + 1) * tile_f * dtype.itemsize
    budget_rows = max(sub, budget_bytes // bytes_per_row)
    tile_n = min(_MAX_TILE_N, budget_rows, n)
    tile_n = max(sub, (tile_n // sub) * sub)

    # v7x has 2 TensorCores: "parallel" axes only shard if the grid has >= 2
    # steps, so split a would-be single-block grid along rows.
    if (two_cores and n >= 2 * sub
            and pl.cdiv(n, tile_n) == 1 and pl.cdiv(f, tile_f) == 1):
        tile_n = max(sub, _round_up(pl.cdiv(n, 2), sub))

    return tile_n, tile_f


def max_jumping_knowledge(xs):
    """xs: list/tuple of same-shape arrays. Elementwise max over the list."""
    xs = list(xs)
    num_layers = len(xs)
    if num_layers == 0:
        raise ValueError("HeteroJumpingKnowledge needs at least one layer.")
    if num_layers == 1:
        return xs[0]

    shape, dtype = xs[0].shape, xs[0].dtype
    for i, x in enumerate(xs[1:], start=1):
        if x.shape != shape or x.dtype != dtype:
            raise ValueError(
                "All JK layers must share shape and dtype; layer 0 has "
                f"{shape}/{dtype} but layer {i} has {x.shape}/{x.dtype}.")

    # Non-2D inputs, very skinny row counts, and tiny node types: let XLA fuse
    # a jnp.maximum chain (a pallas_call would be pure launch overhead).
    total_bytes = (num_layers + 1) * xs[0].size * dtype.itemsize
    if (len(shape) != 2
            or total_bytes < _MIN_PALLAS_BYTES
            or shape[0] < _sublane(dtype)):
        return functools.reduce(jnp.maximum, xs)

    n, f = shape
    budget_bytes, limit_bytes, two_cores = _tpu_params()
    tile_n, tile_f = _choose_tiles(num_layers, n, f, dtype,
                                   budget_bytes, two_cores)
    grid = (pl.cdiv(n, tile_n), pl.cdiv(f, tile_f))
    spec = pl.BlockSpec((tile_n, tile_f), lambda i, j: (i, j))

    cost = pl.CostEstimate(
        flops=(num_layers - 1) * n * f,
        transcendentals=0,
        bytes_accessed=(num_layers + 1) * n * f * dtype.itemsize,
    )

    return pl.pallas_call(
        _make_max_kernel(num_layers),
        out_shape=jax.ShapeDtypeStruct((n, f), dtype),
        grid_spec=pltpu.PrefetchScalarGridSpec(
            num_scalar_prefetch=0,
            grid=grid,
            in_specs=[spec] * num_layers,
            out_specs=spec,
        ),
        compiler_params=pltpu.CompilerParams(
            dimension_semantics=("parallel", "parallel"),
            vmem_limit_bytes=limit_bytes,
        ),
        cost_estimate=cost,
    )(*xs)


class HeteroJumpingKnowledge:
    """JAX/Pallas port of the PyTorch module. Only supports "max" mode."""

    def __init__(self, metadata):
        self.node_types = metadata[0]

    def __call__(self, xs_dict):
        # TODO(synk): batch node types sharing (F, dtype) into one pallas_call;
        # a wrapper-side row-concat would double HBM traffic for this purely
        # mem-bound op, so doing it without regressions needs a manual-DMA
        # schedule over per-type HBM refs rather than BlockSpec concat.
        return {nt: max_jumping_knowledge(xs_dict[nt]) for nt in self.node_types}


if __name__ == "__main__":
    key = jax.random.PRNGKey(0)

    # Synthetic heterogeneous-graph metadata: five node types, 3 GNN layers.
    node_types = ["author", "paper", "venue", "field_of_study", "institution"]
    edge_types = [("author", "writes", "paper")]
    metadata = (node_types, edge_types)

    L = 3
    shapes = {
        "author": (16, 128),           # tiny -> fused jnp.maximum fallback
        "paper": (528, 128),           # Pallas, lane-dense, single row block
        "venue": (1030, 128),          # Pallas bf16, masked edge row block
        "field_of_study": (600, 200),  # Pallas, F not multiple of 128 (edge lane block)
        "institution": (7, 128),       # tiny -> fallback
    }
    dtypes = {
        "author": jnp.float32,
        "paper": jnp.float32,
        "venue": jnp.bfloat16,
        "field_of_study": jnp.float32,
        "institution": jnp.float32,
    }

    xs_dict = {}
    for nt in node_types:
        layers = []
        for _ in range(L):
            key, sub = jax.random.split(key)
            layers.append(jax.random.normal(sub, shapes[nt]).astype(dtypes[nt]))
        xs_dict[nt] = layers

    model = HeteroJumpingKnowledge(metadata)
    out = model(xs_dict)
    for nt in node_types:
        out[nt] = jax.block_until_ready(out[nt])

    # Reference check against plain JAX (mirrors the PyTorch stack + max).
    for nt in node_types:
        ref = jnp.max(jnp.stack(xs_dict[nt], axis=-1), axis=-1)
        assert out[nt].shape == shapes[nt], f"shape mismatch for {nt}"
        assert out[nt].dtype == dtypes[nt], f"dtype mismatch for {nt}"
        assert jnp.array_equal(out[nt], ref), f"value mismatch for node type {nt}"

    print("KERNEL_OK")
</pallas_src>

<mosaic_0001>
module attributes {stable_mosaic.version = 11 : i64} {
  func.func @kernel(%arg0: i32, %arg1: i32, %arg2: memref<528x128xf32, #tpu.memory_space<vmem>>, %arg3: memref<528x128xf32, #tpu.memory_space<vmem>>, %arg4: memref<528x128xf32, #tpu.memory_space<vmem>>, %arg5: memref<528x128xf32, #tpu.memory_space<vmem>>) attributes {dimension_semantics = [#tpu.dimension_semantics<parallel>, #tpu.dimension_semantics<parallel>], iteration_bounds = array<i64: 1, 1>, scalar_prefetch = 0 : i64, scratch_operands = 0 : i64, tpu.core_type = #tpu.core_type<tc>, window_params = [{transform_indices = @transform_0, window_bounds = array<i64: 528, 128>}, {transform_indices = @transform_1, window_bounds = array<i64: 528, 128>}, {transform_indices = @transform_2, window_bounds = array<i64: 528, 128>}, {transform_indices = @transform_3, window_bounds = array<i64: 528, 128>}]} {
    %c0 = arith.constant 0 : index
    %c0_0 = arith.constant 0 : index
    %0 = vector.load %arg2[%c0, %c0_0] : memref<528x128xf32, #tpu.memory_space<vmem>>, vector<528x128xf32>
    %c0_1 = arith.constant 0 : index
    %c0_2 = arith.constant 0 : index
    %1 = vector.load %arg3[%c0_1, %c0_2] : memref<528x128xf32, #tpu.memory_space<vmem>>, vector<528x128xf32>
    %2 = arith.maximumf %0, %1 : vector<528x128xf32>
    %c0_3 = arith.constant 0 : index
    %c0_4 = arith.constant 0 : index
    %3 = vector.load %arg4[%c0_3, %c0_4] : memref<528x128xf32, #tpu.memory_space<vmem>>, vector<528x128xf32>
    %4 = arith.maximumf %2, %3 : vector<528x128xf32>
    %c0_5 = arith.constant 0 : index
    %c0_6 = arith.constant 0 : index
    %5 = vector.load %arg5[%c0_5, %c0_6] : memref<528x128xf32, #tpu.memory_space<vmem>>, vector<528x128xf32>
    tpu.vector_store %arg5[%c0_5, %c0_6], %4 {strides = array<i32>} : memref<528x128xf32, #tpu.memory_space<vmem>>, vector<528x128xf32>,
    return
  }
  func.func @transform_0(%arg0: i32, %arg1: i32) -> (i32, i32) {
    %c0_i32 = arith.constant 0 : i32
    return %arg0, %arg1 : i32, i32
  }
  func.func @transform_1(%arg0: i32, %arg1: i32) -> (i32, i32) {
    %c0_i32 = arith.constant 0 : i32
    return %arg0, %arg1 : i32, i32
  }
  func.func @transform_2(%arg0: i32, %arg1: i32) -> (i32, i32) {
    %c0_i32 = arith.constant 0 : i32
    return %arg0, %arg1 : i32, i32
  }
  func.func @transform_3(%arg0: i32, %arg1: i32) -> (i32, i32) {
    %c0_i32 = arith.constant 0 : i32
    return %arg0, %arg1 : i32, i32
  }
}

</mosaic_0001>

<llo_original>
// kernel: tpu_custom_call.1
$region0: #{tpu_custom_call.1}
  #allocation0 [shape = 'u32[]', space=smem, size = 0x4, offset = 0x4, fixed_abs, tag = 'smem constant byte address 0x4 - core index']
  #allocation1 [shape = 'u32[72,128]{1,0:T(1,128)}', space=vmem, size = 0x9000, scoped, tag = 'internal scratch']
  %s0 = inlined_call_operand.hbm [shape: f32[528,128], index: 0, kind: input, shape index: {}]
  %s1 = inlined_call_operand.hbm [shape: f32[528,128], index: 1, kind: input, shape index: {}]
  %s2 = inlined_call_operand.hbm [shape: f32[528,128], index: 2, kind: input, shape index: {}]
  %s3 = inlined_call_operand.hbm [shape: f32[528,128], index: 3, kind: output, shape index: {}]
  %s4 = sld [smem:[#allocation0]]
  $region34: #{tpu_custom_call.1} parent=0
    _
  %s6 = ssub.s32 1, %s4
  %s7 = scalar_select 0, %s6, %s4
  $region1: #{tpu_custom_call.1} parent=0
    #allocation2 [shape = 'u8[270336]{0}', space=vmem, size = 0x42000, scoped, tag = 'input window, operand 0, single buffered']
    #allocation3 [shape = 's32[1]{0}', space=sflag, size = 0x4, scoped, tag = 'scoped memory for tpu_custom_call.1']
    #allocation4 [shape = 's32[1]{0}', space=sflag, size = 0x4, scoped, tag = 'scoped memory for tpu_custom_call.1']
    #allocation5 [shape = 'u8[270336]{0}', space=vmem, size = 0x42000, scoped, tag = 'input window, operand 1, single buffered']
    #allocation6 [shape = 's32[1]{0}', space=sflag, size = 0x4, scoped, tag = 'scoped memory for tpu_custom_call.1']
    #allocation7 [shape = 'u8[270336]{0}', space=vmem, size = 0x42000, scoped, tag = 'input window, operand 2, single buffered']
    #allocation8 [shape = 'u8[270336]{0}', space=vmem, size = 0x42000, scoped, tag = 'output window, operand 0, single buffered']
    %8 = vsyncpa [#allocation3], 0
    %9 = vsyncpa [#allocation6], 0
    %10 = vsyncpa [#allocation4], 0
    // Predicated region
    $region2: #{tpu_custom_call.1} parent=1 // pred_check
      _
    $region3: #{tpu_custom_call.1} parent=1 // pred_check_branch
      %12 = sbr.rel (0) target = $region5
    $region4: #{tpu_custom_call.1} parent=1 // pred_region
      %14 = vsyncadd [#allocation3], 0
      %s15 = sshll.u32 %s0, 4
      %s16 = int_to_ptr.hbm [resolvable:$true] %s15
      %s17 = sshll.u32 [#allocation2], 4
      %s18 = int_to_ptr.vmem [resolvable:$true] %s17
      %23 = dma.hbm_to_vmem [thread:$0]  %s16, 8448, %s18, [#allocation3], 128, 128, 8
    $region5: #{tpu_custom_call.1} parent=1 // pred_fallthru
      _
    // Predicated region
    $region6: #{tpu_custom_call.1} parent=1 // pred_check
      _
    $region7: #{tpu_custom_call.1} parent=1 // pred_check_branch
      %25 = sbr.rel (0) target = $region9
    $region8: #{tpu_custom_call.1} parent=1 // pred_region
      %27 = vsyncadd [#allocation6], 0
      %s28 = sshll.u32 %s1, 4
      %s29 = int_to_ptr.hbm [resolvable:$true] %s28
      %s30 = sshll.u32 [#allocation5], 4
      %s31 = int_to_ptr.vmem [resolvable:$true] %s30
      %36 = dma.hbm_to_vmem [thread:$0]  %s29, 8448, %s31, [#allocation6], 128, 128, 8
    $region9: #{tpu_custom_call.1} parent=1 // pred_fallthru
      _
    // Predicated region
    $region10: #{tpu_custom_call.1} parent=1 // pred_check
      _
    $region11: #{tpu_custom_call.1} parent=1 // pred_check_branch
      %38 = sbr.rel (0) target = $region13
    $region12: #{tpu_custom_call.1} parent=1 // pred_region
      %40 = vsyncadd [#allocation6], 0
      %s41 = sshll.u32 %s2, 4
      %s42 = int_to_ptr.hbm [resolvable:$true] %s41
      %s43 = sshll.u32 [#allocation7], 4
      %s44 = int_to_ptr.vmem [resolvable:$true] %s43
      %49 = dma.hbm_to_vmem [thread:$0]  %s42, 8448, %s44, [#allocation6], 128, 128, 8
    $region13: #{tpu_custom_call.1} parent=1 // pred_fallthru
      _
    // Predicated region
    $region14: #{tpu_custom_call.1} parent=1 // pred_check
      _
    $region15: #{tpu_custom_call.1} parent=1 // pred_check_branch
      %51 = sbr.rel (0) target = $region17
    $region16: #{tpu_custom_call.1} parent=1 // pred_region
      %53 = dma.done [#allocation3], 8448
    $region17: #{tpu_custom_call.1} parent=1 // pred_fallthru
      _
    // Predicated region
    $region18: #{tpu_custom_call.1} parent=1 // pred_check
      _
    $region19: #{tpu_custom_call.1} parent=1 // pred_check_branch
      %55 = sbr.rel (0) target = $region21
    $region20: #{tpu_custom_call.1} parent=1 // pred_region
      %57 = dma.done [#allocation6], 8448
    $region21: #{tpu_custom_call.1} parent=1 // pred_fallthru
      _
    // Predicated region
    $region22: #{tpu_custom_call.1} parent=1 // pred_check
      _
    $region23: #{tpu_custom_call.1} parent=1 // pred_check_branch
      %59 = sbr.rel (0) target = $region25
    $region24: #{tpu_custom_call.1} parent=1 // pred_region
      %61 = dma.done [#allocation6], 8448
    $region25: #{tpu_custom_call.1} parent=1 // pred_fallthru
      _
    %v62 = vld [vmem:[#allocation2] sm:$0xff]
    %v63 = vld [vmem:[#allocation2 + $0x8] sm:$0xff]
    %v64 = vld [vmem:[#allocation2 + $0x10] sm:$0xff]
    %v65 = vld [vmem:[#allocation2 + $0x18] sm:$0xff]
    %v66 = vld [vmem:[#allocation2 + $0x20] sm:$0xff]
    %v67 = vld [vmem:[#allocation2 + $0x28] sm:$0xff]
    %v68 = vld [vmem:[#allocation2 + $0x30] sm:$0xff]
    %v69 = vld [vmem:[#allocation2 + $0x38] sm:$0xff]
    %v70 = vld [vmem:[#allocation2 + $0x40] sm:$0xff]
    %v71 = vld [vmem:[#allocation2 + $0x48] sm:$0xff]
    %v72 = vld [vmem:[#allocation2 + $0x50] sm:$0xff]
    %v73 = vld [vmem:[#allocation2 + $0x58] sm:$0xff]
    %v74 = vld [vmem:[#allocation2 + $0x60] sm:$0xff]
    %v75 = vld [vmem:[#allocation2 + $0x68] sm:$0xff]
    %v76 = vld [vmem:[#allocation2 + $0x70] sm:$0xff]
    %v77 = vld [vmem:[#allocation2 + $0x78] sm:$0xff]
    %v78 = vld [vmem:[#allocation2 + $0x80] sm:$0xff]
    %v79 = vld [vmem:[#allocation2 + $0x88] sm:$0xff]
    %v80 = vld [vmem:[#allocation2 + $0x90] sm:$0xff]
    %v81 = vld [vmem:[#allocation2 + $0x98] sm:$0xff]
    %v82 = vld [vmem:[#allocation2 + $0xa0] sm:$0xff]
    %v83 = vld [vmem:[#allocation2 + $0xa8] sm:$0xff]
    %v84 = vld [vmem:[#allocation2 + $0xb0] sm:$0xff]
    %v85 = vld [vmem:[#allocation2 + $0xb8] sm:$0xff]
    %v86 = vld [vmem:[#allocation2 + $0xc0] sm:$0xff]
    %v87 = vld [vmem:[#allocation2 + $0xc8] sm:$0xff]
    %v88 = vld [vmem:[#allocation2 + $0xd0] sm:$0xff]
    %v89 = vld [vmem:[#allocation2 + $0xd8] sm:$0xff]
    %v90 = vld [vmem:[#allocation2 + $0xe0] sm:$0xff]
    %v91 = vld [vmem:[#allocation2 + $0xe8] sm:$0xff]
    %v92 = vld [vmem:[#allocation2 + $0xf0] sm:$0xff]
    %v93 = vld [vmem:[#allocation2 + $0xf8] sm:$0xff]
    %v94 = vld [vmem:[#allocation2 + $0x100] sm:$0xff]
    %v95 = vld [vmem:[#allocation2 + $0x108] sm:$0xff]
    %v96 = vld [vmem:[#allocation2 + $0x110] sm:$0xff]
    %v97 = vld [vmem:[#allocation2 + $0x118] sm:$0xff]
    %v98 = vld [vmem:[#allocation2 + $0x120] sm:$0xff]
    %v99 = vld [vmem:[#allocation2 + $0x128] sm:$0xff]
    %v100 = vld [vmem:[#allocation2 + $0x130] sm:$0xff]
    %v101 = vld [vmem:[#allocation2 + $0x138] sm:$0xff]
    %v102 = vld [vmem:[#allocation2 + $0x140] sm:$0xff]
    %v103 = vld [vmem:[#allocation2 + $0x148] sm:$0xff]
    %v104 = vld [vmem:[#allocation2 + $0x150] sm:$0xff]
    %v105 = vld [vmem:[#allocation2 + $0x158] sm:$0xff]
    %v106 = vld [vmem:[#allocation2 + $0x160] sm:$0xff]
    %v107 = vld [vmem:[#allocation2 + $0x168] sm:$0xff]
    %v108 = vld [vmem:[#allocation2 + $0x170] sm:$0xff]
    %v109 = vld [vmem:[#allocation2 + $0x178] sm:$0xff]
    %v110 = vld [vmem:[#allocation2 + $0x180] sm:$0xff]
    %v111 = vld [vmem:[#allocation2 + $0x188] sm:$0xff]
    %v112 = vld [vmem:[#allocation2 + $0x190] sm:$0xff]
    %v113 = vld [vmem:[#allocation2 + $0x198] sm:$0xff]
    %v114 = vld [vmem:[#allocation2 + $0x1a0] sm:$0xff]
    %v115 = vld [vmem:[#allocation2 + $0x1a8] sm:$0xff]
    %v116 = vld [vmem:[#allocation2 + $0x1b0] sm:$0xff]
    %v117 = vld [vmem:[#allocation2 + $0x1b8] sm:$0xff]
    %v118 = vld [vmem:[#allocation2 + $0x1c0] sm:$0xff]
    %v119 = vld [vmem:[#allocation2 + $0x1c8] sm:$0xff]
    %v120 = vld [vmem:[#allocation2 + $0x1d0] sm:$0xff]
    %v121 = vld [vmem:[#allocation2 + $0x1d8] sm:$0xff]
    %v122 = vld [vmem:[#allocation2 + $0x1e0] sm:$0xff]
    %v123 = vld [vmem:[#allocation2 + $0x1e8] sm:$0xff]
    %v124 = vld [vmem:[#allocation2 + $0x1f0] sm:$0xff]
    %v125 = vld [vmem:[#allocation2 + $0x1f8] sm:$0xff]
    %v126 = vld [vmem:[#allocation2 + $0x200] sm:$0xff]
    %v127 = vld [vmem:[#allocation2 + $0x208] sm:$0xff]
    %v128 = vld [vmem:[#allocation5] sm:$0xff]
    %v129 = vld [vmem:[#allocation5 + $0x8] sm:$0xff]
    %v130 = vld [vmem:[#allocation5 + $0x10] sm:$0xff]
    %v131 = vld [vmem:[#allocation5 + $0x18] sm:$0xff]
    %v132 = vld [vmem:[#allocation5 + $0x20] sm:$0xff]
    %v133 = vld [vmem:[#allocation5 + $0x28] sm:$0xff]
    %v134 = vld [vmem:[#allocation5 + $0x30] sm:$0xff]
    %v135 = vld [vmem:[#allocation5 + $0x38] sm:$0xff]
    %v136 = vld [vmem:[#allocation5 + $0x40] sm:$0xff]
    %v137 = vld [vmem:[#allocation5 + $0x48] sm:$0xff]
    %v138 = vld [vmem:[#allocation5 + $0x50] sm:$0xff]
    %v139 = vld [vmem:[#allocation5 + $0x58] sm:$0xff]
    %v140 = vld [vmem:[#allocation5 + $0x60] sm:$0xff]
    %v141 = vld [vmem:[#allocation5 + $0x68] sm:$0xff]
    %v142 = vld [vmem:[#allocation5 + $0x70] sm:$0xff]
    %v143 = vld [vmem:[#allocation5 + $0x78] sm:$0xff]
    %v144 = vld [vmem:[#allocation5 + $0x80] sm:$0xff]
    %v145 = vld [vmem:[#allocation5 + $0x88] sm:$0xff]
    %v146 = vld [vmem:[#allocation5 + $0x90] sm:$0xff]
    %v147 = vld [vmem:[#allocation5 + $0x98] sm:$0xff]
    %v148 = vld [vmem:[#allocation5 + $0xa0] sm:$0xff]
    %v149 = vld [vmem:[#allocation5 + $0xa8] sm:$0xff]
    %v150 = vld [vmem:[#allocation5 + $0xb0] sm:$0xff]
    %v151 = vld [vmem:[#allocation5 + $0xb8] sm:$0xff]
    %v152 = vld [vmem:[#allocation5 + $0xc0] sm:$0xff]
    %v153 = vld [vmem:[#allocation5 + $0xc8] sm:$0xff]
    %v154 = vld [vmem:[#allocation5 + $0xd0] sm:$0xff]
    %v155 = vld [vmem:[#allocation5 + $0xd8] sm:$0xff]
    %v156 = vld [vmem:[#allocation5 + $0xe0] sm:$0xff]
    %v157 = vld [vmem:[#allocation5 + $0xe8] sm:$0xff]
    %v158 = vld [vmem:[#allocation5 + $0xf0] sm:$0xff]
    %v159 = vld [vmem:[#allocation5 + $0xf8] sm:$0xff]
    %v160 = vld [vmem:[#allocation5 + $0x100] sm:$0xff]
    %v161 = vld [vmem:[#allocation5 + $0x108] sm:$0xff]
    %v162 = vld [vmem:[#allocation5 + $0x110] sm:$0xff]
    %v163 = vld [vmem:[#allocation5 + $0x118] sm:$0xff]
    %v164 = vld [vmem:[#allocation5 + $0x120] sm:$0xff]
    %v165 = vld [vmem:[#allocation5 + $0x128] sm:$0xff]
    %v166 = vld [vmem:[#allocation5 + $0x130] sm:$0xff]
    %v167 = vld [vmem:[#allocation5 + $0x138] sm:$0xff]
    %v168 = vld [vmem:[#allocation5 + $0x140] sm:$0xff]
    %v169 = vld [vmem:[#allocation5 + $0x148] sm:$0xff]
    %v170 = vld [vmem:[#allocation5 + $0x150] sm:$0xff]
    %v171 = vld [vmem:[#allocation5 + $0x158] sm:$0xff]
    %v172 = vld [vmem:[#allocation5 + $0x160] sm:$0xff]
    %v173 = vld [vmem:[#allocation5 + $0x168] sm:$0xff]
    %v174 = vld [vmem:[#allocation5 + $0x170] sm:$0xff]
    %v175 = vld [vmem:[#allocation5 + $0x178] sm:$0xff]
    %v176 = vld [vmem:[#allocation5 + $0x180] sm:$0xff]
    %v177 = vld [vmem:[#allocation5 + $0x188] sm:$0xff]
    %v178 = vld [vmem:[#allocation5 + $0x190] sm:$0xff]
    %v179 = vld [vmem:[#allocation5 + $0x198] sm:$0xff]
    %v180 = vld [vmem:[#allocation5 + $0x1a0] sm:$0xff]
    %v181 = vld [vmem:[#allocation5 + $0x1a8] sm:$0xff]
    %v182 = vld [vmem:[#allocation5 + $0x1b0] sm:$0xff]
    %v183 = vld [vmem:[#allocation5 + $0x1b8] sm:$0xff]
    %v184 = vld [vmem:[#allocation5 + $0x1c0] sm:$0xff]
    %v185 = vld [vmem:[#allocation5 + $0x1c8] sm:$0xff]
    %v186 = vld [vmem:[#allocation5 + $0x1d0] sm:$0xff]
    %v187 = vld [vmem:[#allocation5 + $0x1d8] sm:$0xff]
    %v188 = vld [vmem:[#allocation5 + $0x1e0] sm:$0xff]
    %v189 = vld [vmem:[#allocation5 + $0x1e8] sm:$0xff]
    %v190 = vld [vmem:[#allocation5 + $0x1f0] sm:$0xff]
    %v191 = vld [vmem:[#allocation5 + $0x1f8] sm:$0xff]
    %v192 = vld [vmem:[#allocation5 + $0x200] sm:$0xff]
    %v193 = vld [vmem:[#allocation5 + $0x208] sm:$0xff]
    %v194 = vmax.f32 %v62, %v128
    %v195 = vmax.f32 %v63, %v129
    %v196 = vmax.f32 %v64, %v130
    %v197 = vmax.f32 %v65, %v131
    %v198 = vmax.f32 %v66, %v132
    %v199 = vmax.f32 %v67, %v133
    %v200 = vmax.f32 %v68, %v134
    %v201 = vmax.f32 %v69, %v135
    %v202 = vmax.f32 %v70, %v136
    %v203 = vmax.f32 %v71, %v137
    %v204 = vmax.f32 %v72, %v138
    %v205 = vmax.f32 %v73, %v139
    %v206 = vmax.f32 %v74, %v140
    %v207 = vmax.f32 %v75, %v141
    %v208 = vmax.f32 %v76, %v142
    %v209 = vmax.f32 %v77, %v143
    %v210 = vmax.f32 %v78, %v144
    %v211 = vmax.f32 %v79, %v145
    %v212 = vmax.f32 %v80, %v146
    %v213 = vmax.f32 %v81, %v147
    %v214 = vmax.f32 %v82, %v148
    %v215 = vmax.f32 %v83, %v149
    %v216 = vmax.f32 %v84, %v150
    %v217 = vmax.f32 %v85, %v151
    %v218 = vmax.f32 %v86, %v152
    %v219 = vmax.f32 %v87, %v153
    %v220 = vmax.f32 %v88, %v154
    %v221 = vmax.f32 %v89, %v155
    %v222 = vmax.f32 %v90, %v156
    %v223 = vmax.f32 %v91, %v157
    %v224 = vmax.f32 %v92, %v158
    %v225 = vmax.f32 %v93, %v159
    %v226 = vmax.f32 %v94, %v160
    %v227 = vmax.f32 %v95, %v161
    %v228 = vmax.f32 %v96, %v162
    %v229 = vmax.f32 %v97, %v163
    %v230 = vmax.f32 %v98, %v164
    %v231 = vmax.f32 %v99, %v165
    %v232 = vmax.f32 %v100, %v166
    %v233 = vmax.f32 %v101, %v167
    %v234 = vmax.f32 %v102, %v168
    %v235 = vmax.f32 %v103, %v169
    %v236 = vmax.f32 %v104, %v170
    %v237 = vmax.f32 %v105, %v171
    %v238 = vmax.f32 %v106, %v172
    %v239 = vmax.f32 %v107, %v173
    %v240 = vmax.f32 %v108, %v174
    %v241 = vmax.f32 %v109, %v175
    %v242 = vmax.f32 %v110, %v176
    %v243 = vmax.f32 %v111, %v177
    %v244 = vmax.f32 %v112, %v178
    %v245 = vmax.f32 %v113, %v179
    %v246 = vmax.f32 %v114, %v180
    %v247 = vmax.f32 %v115, %v181
    %v248 = vmax.f32 %v116, %v182
    %v249 = vmax.f32 %v117, %v183
    %v250 = vmax.f32 %v118, %v184
    %v251 = vmax.f32 %v119, %v185
    %v252 = vmax.f32 %v120, %v186
    %v253 = vmax.f32 %v121, %v187
    %v254 = vmax.f32 %v122, %v188
    %v255 = vmax.f32 %v123, %v189
    %v256 = vmax.f32 %v124, %v190
    %v257 = vmax.f32 %v125, %v191
    %v258 = vmax.f32 %v126, %v192
    %v259 = vmax.f32 %v127, %v193
    %v260 = vld [vmem:[#allocation7] sm:$0xff]
    %v261 = vld [vmem:[#allocation7 + $0x8] sm:$0xff]
    %v262 = vld [vmem:[#allocation7 + $0x10] sm:$0xff]
    %v263 = vld [vmem:[#allocation7 + $0x18] sm:$0xff]
    %v264 = vld [vmem:[#allocation7 + $0x20] sm:$0xff]
    %v265 = vld [vmem:[#allocation7 + $0x28] sm:$0xff]
    %v266 = vld [vmem:[#allocation7 + $0x30] sm:$0xff]
    %v267 = vld [vmem:[#allocation7 + $0x38] sm:$0xff]
    %v268 = vld [vmem:[#allocation7 + $0x40] sm:$0xff]
    %v269 = vld [vmem:[#allocation7 + $0x48] sm:$0xff]
    %v270 = vld [vmem:[#allocation7 + $0x50] sm:$0xff]
    %v271 = vld [vmem:[#allocation7 + $0x58] sm:$0xff]
    %v272 = vld [vmem:[#allocation7 + $0x60] sm:$0xff]
    %v273 = vld [vmem:[#allocation7 + $0x68] sm:$0xff]
    %v274 = vld [vmem:[#allocation7 + $0x70] sm:$0xff]
    %v275 = vld [vmem:[#allocation7 + $0x78] sm:$0xff]
    %v276 = vld [vmem:[#allocation7 + $0x80] sm:$0xff]
    %v277 = vld [vmem:[#allocation7 + $0x88] sm:$0xff]
    %v278 = vld [vmem:[#allocation7 + $0x90] sm:$0xff]
    %v279 = vld [vmem:[#allocation7 + $0x98] sm:$0xff]
    %v280 = vld [vmem:[#allocation7 + $0xa0] sm:$0xff]
    %v281 = vld [vmem:[#allocation7 + $0xa8] sm:$0xff]
    %v282 = vld [vmem:[#allocation7 + $0xb0] sm:$0xff]
    %v283 = vld [vmem:[#allocation7 + $0xb8] sm:$0xff]
    %v284 = vld [vmem:[#allocation7 + $0xc0] sm:$0xff]
    %v285 = vld [vmem:[#allocation7 + $0xc8] sm:$0xff]
    %v286 = vld [vmem:[#allocation7 + $0xd0] sm:$0xff]
    %v287 = vld [vmem:[#allocation7 + $0xd8] sm:$0xff]
    %v288 = vld [vmem:[#allocation7 + $0xe0] sm:$0xff]
    %v289 = vld [vmem:[#allocation7 + $0xe8] sm:$0xff]
    %v290 = vld [vmem:[#allocation7 + $0xf0] sm:$0xff]
    %v291 = vld [vmem:[#allocation7 + $0xf8] sm:$0xff]
    %v292 = vld [vmem:[#allocation7 + $0x100] sm:$0xff]
    %v293 = vld [vmem:[#allocation7 + $0x108] sm:$0xff]
    %v294 = vld [vmem:[#allocation7 + $0x110] sm:$0xff]
    %v295 = vld [vmem:[#allocation7 + $0x118] sm:$0xff]
    %v296 = vld [vmem:[#allocation7 + $0x120] sm:$0xff]
    %v297 = vld [vmem:[#allocation7 + $0x128] sm:$0xff]
    %v298 = vld [vmem:[#allocation7 + $0x130] sm:$0xff]
    %v299 = vld [vmem:[#allocation7 + $0x138] sm:$0xff]
    %v300 = vld [vmem:[#allocation7 + $0x140] sm:$0xff]
    %v301 = vld [vmem:[#allocation7 + $0x148] sm:$0xff]
    %v302 = vld [vmem:[#allocation7 + $0x150] sm:$0xff]
    %v303 = vld [vmem:[#allocation7 + $0x158] sm:$0xff]
    %v304 = vld [vmem:[#allocation7 + $0x160] sm:$0xff]
    %v305 = vld [vmem:[#allocation7 + $0x168] sm:$0xff]
    %v306 = vld [vmem:[#allocation7 + $0x170] sm:$0xff]
    %v307 = vld [vmem:[#allocation7 + $0x178] sm:$0xff]
    %v308 = vld [vmem:[#allocation7 + $0x180] sm:$0xff]
    %v309 = vld [vmem:[#allocation7 + $0x188] sm:$0xff]
    %v310 = vld [vmem:[#allocation7 + $0x190] sm:$0xff]
    %v311 = vld [vmem:[#allocation7 + $0x198] sm:$0xff]
    %v312 = vld [vmem:[#allocation7 + $0x1a0] sm:$0xff]
    %v313 = vld [vmem:[#allocation7 + $0x1a8] sm:$0xff]
    %v314 = vld [vmem:[#allocation7 + $0x1b0] sm:$0xff]
    %v315 = vld [vmem:[#allocation7 + $0x1b8] sm:$0xff]
    %v316 = vld [vmem:[#allocation7 + $0x1c0] sm:$0xff]
    %v317 = vld [vmem:[#allocation7 + $0x1c8] sm:$0xff]
    %v318 = vld [vmem:[#allocation7 + $0x1d0] sm:$0xff]
    %v319 = vld [vmem:[#allocation7 + $0x1d8] sm:$0xff]
    %v320 = vld [vmem:[#allocation7 + $0x1e0] sm:$0xff]
    %v321 = vld [vmem:[#allocation7 + $0x1e8] sm:$0xff]
    %v322 = vld [vmem:[#allocation7 + $0x1f0] sm:$0xff]
    %v323 = vld [vmem:[#allocation7 + $0x1f8] sm:$0xff]
    %v324 = vld [vmem:[#allocation7 + $0x200] sm:$0xff]
    %v325 = vld [vmem:[#allocation7 + $0x208] sm:$0xff]
    %v326 = vmax.f32 %v194, %v260
    %v327 = vmax.f32 %v195, %v261
    %v328 = vmax.f32 %v196, %v262
    %v329 = vmax.f32 %v197, %v263
    %v330 = vmax.f32 %v198, %v264
    %v331 = vmax.f32 %v199, %v265
    %v332 = vmax.f32 %v200, %v266
    %v333 = vmax.f32 %v201, %v267
    %v334 = vmax.f32 %v202, %v268
    %v335 = vmax.f32 %v203, %v269
    %v336 = vmax.f32 %v204, %v270
    %v337 = vmax.f32 %v205, %v271
    %v338 = vmax.f32 %v206, %v272
    %v339 = vmax.f32 %v207, %v273
    %v340 = vmax.f32 %v208, %v274
    %v341 = vmax.f32 %v209, %v275
    %v342 = vmax.f32 %v210, %v276
    %v343 = vmax.f32 %v211, %v277
    %v344 = vmax.f32 %v212, %v278
    %v345 = vmax.f32 %v213, %v279
    %v346 = vmax.f32 %v214, %v280
    %v347 = vmax.f32 %v215, %v281
    %v348 = vmax.f32 %v216, %v282
    %v349 = vmax.f32 %v217, %v283
    %v350 = vmax.f32 %v218, %v284
    %v351 = vmax.f32 %v219, %v285
    %v352 = vmax.f32 %v220, %v286
    %v353 = vmax.f32 %v221, %v287
    %v354 = vmax.f32 %v222, %v288
    %v355 = vmax.f32 %v223, %v289
    %v356 = vmax.f32 %v224, %v290
    %v357 = vmax.f32 %v225, %v291
    %v358 = vmax.f32 %v226, %v292
    %v359 = vmax.f32 %v227, %v293
    %v360 = vmax.f32 %v228, %v294
    %v361 = vmax.f32 %v229, %v295
    %v362 = vmax.f32 %v230, %v296
    %v363 = vmax.f32 %v231, %v297
    %v364 = vmax.f32 %v232, %v298
    %v365 = vmax.f32 %v233, %v299
    %v366 = vmax.f32 %v234, %v300
    %v367 = vmax.f32 %v235, %v301
    %v368 = vmax.f32 %v236, %v302
    %v369 = vmax.f32 %v237, %v303
    %v370 = vmax.f32 %v238, %v304
    %v371 = vmax.f32 %v239, %v305
    %v372 = vmax.f32 %v240, %v306
    %v373 = vmax.f32 %v241, %v307
    %v374 = vmax.f32 %v242, %v308
    %v375 = vmax.f32 %v243, %v309
    %v376 = vmax.f32 %v244, %v310
    %v377 = vmax.f32 %v245, %v311
    %v378 = vmax.f32 %v246, %v312
    %v379 = vmax.f32 %v247, %v313
    %v380 = vmax.f32 %v248, %v314
    %v381 = vmax.f32 %v249, %v315
    %v382 = vmax.f32 %v250, %v316
    %v383 = vmax.f32 %v251, %v317
    %v384 = vmax.f32 %v252, %v318
    %v385 = vmax.f32 %v253, %v319
    %v386 = vmax.f32 %v254, %v320
    %v387 = vmax.f32 %v255, %v321
    %v388 = vmax.f32 %v256, %v322
    %v389 = vmax.f32 %v257, %v323
    %v390 = vmax.f32 %v258, %v324
    %v391 = vmax.f32 %v259, %v325
    %392 = vst [vmem:[#allocation8] sm:$0xff] %v326
    %393 = vst [vmem:[#allocation8 + $0x8] sm:$0xff] %v327
    %394 = vst [vmem:[#allocation8 + $0x10] sm:$0xff] %v328
    %395 = vst [vmem:[#allocation8 + $0x18] sm:$0xff] %v329
    %396 = vst [vmem:[#allocation8 + $0x20] sm:$0xff] %v330
    %397 = vst [vmem:[#allocation8 + $0x28] sm:$0xff] %v331
    %398 = vst [vmem:[#allocation8 + $0x30] sm:$0xff] %v332
    %399 = vst [vmem:[#allocation8 + $0x38] sm:$0xff] %v333
    %400 = vst [vmem:[#allocation8 + $0x40] sm:$0xff] %v334
    %401 = vst [vmem:[#allocation8 + $0x48] sm:$0xff] %v335
    %402 = vst [vmem:[#allocation8 + $0x50] sm:$0xff] %v336
    %403 = vst [vmem:[#allocation8 + $0x58] sm:$0xff] %v337
    %404 = vst [vmem:[#allocation8 + $0x60] sm:$0xff] %v338
    %405 = vst [vmem:[#allocation8 + $0x68] sm:$0xff] %v339
    %406 = vst [vmem:[#allocation8 + $0x70] sm:$0xff] %v340
    %407 = vst [vmem:[#allocation8 + $0x78] sm:$0xff] %v341
    %408 = vst [vmem:[#allocation8 + $0x80] sm:$0xff] %v342
    %409 = vst [vmem:[#allocation8 + $0x88] sm:$0xff] %v343
    %410 = vst [vmem:[#allocation8 + $0x90] sm:$0xff] %v344
    %411 = vst [vmem:[#allocation8 + $0x98] sm:$0xff] %v345
    %412 = vst [vmem:[#allocation8 + $0xa0] sm:$0xff] %v346
    %413 = vst [vmem:[#allocation8 + $0xa8] sm:$0xff] %v347
    %414 = vst [vmem:[#allocation8 + $0xb0] sm:$0xff] %v348
    %415 = vst [vmem:[#allocation8 + $0xb8] sm:$0xff] %v349
    %416 = vst [vmem:[#allocation8 + $0xc0] sm:$0xff] %v350
    %417 = vst [vmem:[#allocation8 + $0xc8] sm:$0xff] %v351
    %418 = vst [vmem:[#allocation8 + $0xd0] sm:$0xff] %v352
    %419 = vst [vmem:[#allocation8 + $0xd8] sm:$0xff] %v353
    %420 = vst [vmem:[#allocation8 + $0xe0] sm:$0xff] %v354
    %421 = vst [vmem:[#allocation8 + $0xe8] sm:$0xff] %v355
    %422 = vst [vmem:[#allocation8 + $0xf0] sm:$0xff] %v356
    %423 = vst [vmem:[#allocation8 + $0xf8] sm:$0xff] %v357
    %424 = vst [vmem:[#allocation8 + $0x100] sm:$0xff] %v358
    %425 = vst [vmem:[#allocation8 + $0x108] sm:$0xff] %v359
    %426 = vst [vmem:[#allocation8 + $0x110] sm:$0xff] %v360
    %427 = vst [vmem:[#allocation8 + $0x118] sm:$0xff] %v361
    %428 = vst [vmem:[#allocation8 + $0x120] sm:$0xff] %v362
    %429 = vst [vmem:[#allocation8 + $0x128] sm:$0xff] %v363
    %430 = vst [vmem:[#allocation8 + $0x130] sm:$0xff] %v364
    %431 = vst [vmem:[#allocation8 + $0x138] sm:$0xff] %v365
    %432 = vst [vmem:[#allocation8 + $0x140] sm:$0xff] %v366
    %433 = vst [vmem:[#allocation8 + $0x148] sm:$0xff] %v367
    %434 = vst [vmem:[#allocation8 + $0x150] sm:$0xff] %v368
    %435 = vst [vmem:[#allocation8 + $0x158] sm:$0xff] %v369
    %436 = vst [vmem:[#allocation8 + $0x160] sm:$0xff] %v370
    %437 = vst [vmem:[#allocation8 + $0x168] sm:$0xff] %v371
    %438 = vst [vmem:[#allocation8 + $0x170] sm:$0xff] %v372
    %439 = vst [vmem:[#allocation8 + $0x178] sm:$0xff] %v373
    %440 = vst [vmem:[#allocation8 + $0x180] sm:$0xff] %v374
    %441 = vst [vmem:[#allocation8 + $0x188] sm:$0xff] %v375
    %442 = vst [vmem:[#allocation8 + $0x190] sm:$0xff] %v376
    %443 = vst [vmem:[#allocation8 + $0x198] sm:$0xff] %v377
    %444 = vst [vmem:[#allocation8 + $0x1a0] sm:$0xff] %v378
    %445 = vst [vmem:[#allocation8 + $0x1a8] sm:$0xff] %v379
    %446 = vst [vmem:[#allocation8 + $0x1b0] sm:$0xff] %v380
    %447 = vst [vmem:[#allocation8 + $0x1b8] sm:$0xff] %v381
    %448 = vst [vmem:[#allocation8 + $0x1c0] sm:$0xff] %v382
    %449 = vst [vmem:[#allocation8 + $0x1c8] sm:$0xff] %v383
    %450 = vst [vmem:[#allocation8 + $0x1d0] sm:$0xff] %v384
    %451 = vst [vmem:[#allocation8 + $0x1d8] sm:$0xff] %v385
    %452 = vst [vmem:[#allocation8 + $0x1e0] sm:$0xff] %v386
    %453 = vst [vmem:[#allocation8 + $0x1e8] sm:$0xff] %v387
    %454 = vst [vmem:[#allocation8 + $0x1f0] sm:$0xff] %v388
    %455 = vst [vmem:[#allocation8 + $0x1f8] sm:$0xff] %v389
    %456 = vst [vmem:[#allocation8 + $0x200] sm:$0xff] %v390
    %457 = vst [vmem:[#allocation8 + $0x208] sm:$0xff] %v391
    // Predicated region
    $region26: #{tpu_custom_call.1} parent=1 // pred_check
      _
    $region27: #{tpu_custom_call.1} parent=1 // pred_check_branch
      %459 = sbr.rel (0) target = $region29
    $region28: #{tpu_custom_call.1} parent=1 // pred_region
      %461 = vsyncadd [#allocation4], 0
      %s462 = sshll.u32 [#allocation8], 4
      %s463 = int_to_ptr.vmem [resolvable:$true] %s462
      %s464 = sshll.u32 %s3, 4
      %s465 = int_to_ptr.hbm [resolvable:$true] %s464
      %470 = dma.vmem_to_hbm [thread:$0]  %s463, 8448, %s465, [#allocation4], 128, 128, 8
    $region29: #{tpu_custom_call.1} parent=1 // pred_fallthru
      _
    // Predicated region
    $region30: #{tpu_custom_call.1} parent=1 // pred_check
      _
    $region31: #{tpu_custom_call.1} parent=1 // pred_check_branch
      %472 = sbr.rel (0) target = $region33
    $region32: #{tpu_custom_call.1} parent=1 // pred_region
      %474 = dma.done [#allocation4], 8448
    $region33: #{tpu_custom_call.1} parent=1 // pred_fallthru
      _
    %475 = vsyncpa [#allocation3], 1
    %476 = vsyncpa [#allocation6], 1
    %477 = vsyncpa [#allocation4], 1

</llo_original>
